<compile_context>
chip_gen: v7x
topology: tpu7x:2x2x1
jax: 0.10.0
libtpu: 0.0.40
codegen_flags: <defaults>
</compile_context>

<pallas_src>
import numpy as np
import jax
import jax.numpy as jnp
from jax import lax
from jax.experimental import pallas as pl
from jax.experimental.pallas import tpu as pltpu

_LANE = 128
_SUBLANE = 8


def _round_up(n, m):
    return -(-n // m) * m


def _apply_power(d, p):
    """|d| ** p using VALU-only ops for integer p."""
    if p == 2:
        return d * d                      # |d|^2 == d*d
    if p == 1:
        return jnp.abs(d)
    if isinstance(p, int) and p > 0:
        base = d if (p % 2 == 0) else jnp.abs(d)
        return lax.integer_pow(base, p)   # repeated multiplies, no exp/log
    return jnp.abs(d) ** p                # non-integer p: EUP path


def _make_pair_diff_kernel(pairs, p):
    """Kernel over one sublane chunk: x_ref (B, TS, 128) -> o_ref (P, TS, 128)."""

    def kernel(x_ref, o_ref):
        for k, (i0, i1) in enumerate(pairs):     # static indices -> static slices
            d = x_ref[i0] - x_ref[i1]            # (TS, 128)
            o_ref[k] = _apply_power(d, p).astype(o_ref.dtype)

    return kernel


def _choose_chunking(S, max_ts):
    """Pick (n_chunks, TS, S_pad): TS*n_chunks == S_pad >= S.

    Prefers an exact divisor of S (no padding copy); TS is either the full S
    (single chunk) or a multiple of 8 (sublane constraint)."""
    if S <= max_ts:
        return 1, S, S
    n0 = -(-S // max_ts)
    if S % _SUBLANE == 0:
        for n in range(n0, min(S // _SUBLANE, n0 + 64) + 1):
            if S % n == 0 and (S // n) % _SUBLANE == 0:
                return n, S // n, S               # exact tiling, zero padding
    ts = max(_SUBLANE, (max_ts // _SUBLANE) * _SUBLANE)
    n = -(-S // ts)
    return n, ts, n * ts                          # fallback: pad S up


def _pair_diff_level(x, pairs, p, *, block_budget_bytes=8 * 1024 * 1024,
                     vmem_limit_bytes=64 * 1024 * 1024):
    """(B, C, H, W) -> (n_pairs, C, H, W) per-pair |diff|**p for one level."""
    B = x.shape[0]
    feat_shape = tuple(x.shape[1:])
    D = int(np.prod(feat_shape))
    P = len(pairs)
    dtype = x.dtype
    itemsize = jnp.dtype(dtype).itemsize

    # Flatten features (free, contiguous view); pad lanes only if needed.
    D_pad = _round_up(max(D, _LANE), _LANE)
    xf = x.reshape(B, D)
    if D_pad > D:
        xf = jnp.pad(xf, ((0, 0), (0, D_pad - D)))
    S = D_pad // _LANE

    # Chunk width under a fixed VMEM block budget (double-buffered in+out).
    max_ts = block_budget_bytes // (2 * (B + P) * _LANE * itemsize)
    max_ts = max(_SUBLANE, (max_ts // _SUBLANE) * _SUBLANE)
    n_chunks, TS, S_pad = _choose_chunking(S, max_ts)
    if S_pad > S:
        xf = jnp.pad(xf, ((0, 0), (0, (S_pad - S) * _LANE)))
    x3 = xf.reshape(B, S_pad, _LANE)              # free view

    n_elem = S_pad * _LANE
    out = pl.pallas_call(
        _make_pair_diff_kernel(pairs, p),
        out_shape=jax.ShapeDtypeStruct((P, S_pad, _LANE), dtype),
        grid_spec=pltpu.PrefetchScalarGridSpec(
            num_scalar_prefetch=0,
            grid=(n_chunks,),
            in_specs=[pl.BlockSpec((B, TS, _LANE), lambda j: (0, j, 0))],
            out_specs=pl.BlockSpec((P, TS, _LANE), lambda j: (0, j, 0)),
        ),
        compiler_params=pltpu.CompilerParams(
            dimension_semantics=("parallel",),     # chunks are independent
            vmem_limit_bytes=vmem_limit_bytes,
        ),
        cost_estimate=pl.CostEstimate(
            flops=2 * P * n_elem,
            transcendentals=0 if isinstance(p, int) else P * n_elem,
            bytes_accessed=(B + P) * n_elem * itemsize),
    )(x3)

    out = out.reshape(P, n_elem)
    if n_elem > D:
        out = out[:, :D]
    return out.reshape((P,) + feat_shape)


def batch_diff_pyramid(pyramid, pairs, p):
    """Per-pair |x[i0] - x[i1]|**p for every level of a feature pyramid."""
    if not pyramid:
        return []
    B = pyramid[0].shape[0]
    for x in pyramid:
        assert x.shape[0] == B, "all pyramid levels must share the batch dim"
    if len(pairs) == 0:  # batchsize == 1 -> empty outputs, no kernel launch
        return [jnp.zeros((0,) + tuple(x.shape[1:]), x.dtype) for x in pyramid]
    return [_pair_diff_level(x, pairs, p) for x in pyramid]


class BatchDiffLossPallas:
    """JAX/Pallas equivalent of the PyTorch BatchDiffLoss module."""

    def __init__(self, batchsize=2, p=2):
        i0, i1 = np.triu_indices(n=batchsize, k=1)
        self.pairs = [(int(a), int(b)) for a, b in zip(i0, i1)]  # static
        self.idx0 = jnp.asarray(i0, dtype=jnp.int32)  # kept for reference use
        self.idx1 = jnp.asarray(i1, dtype=jnp.int32)
        self.p = p

    def __call__(self, pyramid):
        return batch_diff_pyramid(pyramid, self.pairs, self.p)


def _reference(pyramid, idx0, idx1, p):
    return [jnp.abs(x[idx0] - x[idx1]) ** p for x in pyramid]


if __name__ == "__main__":
    key = jax.random.PRNGKey(0)
    B, C = 2, 4
    # small feature pyramid: 3 levels, NCHW
    shapes = [(B, C, 16, 16), (B, C, 8, 8), (B, C, 4, 4)]
    keys = jax.random.split(key, len(shapes))
    pyramid = [jax.random.normal(k, s, dtype=jnp.float32)
               for k, s in zip(keys, shapes)]

    loss_mod = BatchDiffLossPallas(batchsize=B, p=2)
    outs = loss_mod(pyramid)
    outs = [jax.block_until_ready(o) for o in outs]

    refs = _reference(pyramid, loss_mod.idx0, loss_mod.idx1, loss_mod.p)
    for o, r in zip(outs, refs):
        assert o.shape == r.shape, (o.shape, r.shape)
        np.testing.assert_allclose(np.asarray(o), np.asarray(r),
                                   rtol=1e-5, atol=1e-5)

    print("KERNEL_OK")
</pallas_src>

<mosaic_0001>
module attributes {stable_mosaic.version = 11 : i64} {
  func.func @kernel(%arg0: i32, %arg1: memref<2x8x128xf32, #tpu.memory_space<vmem>>, %arg2: memref<1x8x128xf32, #tpu.memory_space<vmem>>) attributes {dimension_semantics = [#tpu.dimension_semantics<parallel>], iteration_bounds = array<i64: 1>, scalar_prefetch = 0 : i64, scratch_operands = 0 : i64, tpu.core_type = #tpu.core_type<tc>, window_params = [{transform_indices = @transform_0, window_bounds = array<i64: 2, 8, 128>}, {transform_indices = @transform_1, window_bounds = array<i64: 1, 8, 128>}]} {
    %c0 = arith.constant 0 : index
    %c0_0 = arith.constant 0 : index
    %c0_1 = arith.constant 0 : index
    %0 = vector.load %arg1[%c0, %c0_0, %c0_1] : memref<2x8x128xf32, #tpu.memory_space<vmem>>, vector<1x8x128xf32>
    %1 = vector.shape_cast %0 : vector<1x8x128xf32> to vector<8x128xf32>
    %c1 = arith.constant 1 : index
    %c0_2 = arith.constant 0 : index
    %c0_3 = arith.constant 0 : index
    %2 = vector.load %arg1[%c1, %c0_2, %c0_3] : memref<2x8x128xf32, #tpu.memory_space<vmem>>, vector<1x8x128xf32>
    %3 = vector.shape_cast %2 : vector<1x8x128xf32> to vector<8x128xf32>
    %4 = arith.subf %1, %3 : vector<8x128xf32>
    %5 = arith.mulf %4, %4 : vector<8x128xf32>
    %c0_4 = arith.constant 0 : index
    %c0_5 = arith.constant 0 : index
    %c0_6 = arith.constant 0 : index
    %6 = vector.load %arg2[%c0_4, %c0_5, %c0_6] : memref<1x8x128xf32, #tpu.memory_space<vmem>>, vector<1x8x128xf32>
    %7 = vector.shape_cast %6 : vector<1x8x128xf32> to vector<8x128xf32>
    %8 = vector.shape_cast %5 : vector<8x128xf32> to vector<1x8x128xf32>
    tpu.vector_store %arg2[%c0_4, %c0_5, %c0_6], %8 {strides = array<i32>} : memref<1x8x128xf32, #tpu.memory_space<vmem>>, vector<1x8x128xf32>,
    return
  }
  func.func @transform_0(%arg0: i32) -> (i32, i32, i32) {
    %c0_i32 = arith.constant 0 : i32
    %c0_i32_0 = arith.constant 0 : i32
    %c0_i32_1 = arith.constant 0 : i32
    return %c0_i32, %arg0, %c0_i32_0 : i32, i32, i32
  }
  func.func @transform_1(%arg0: i32) -> (i32, i32, i32) {
    %c0_i32 = arith.constant 0 : i32
    %c0_i32_0 = arith.constant 0 : i32
    %c0_i32_1 = arith.constant 0 : i32
    return %c0_i32, %arg0, %c0_i32_0 : i32, i32, i32
  }
}

</mosaic_0001>

<llo_original>
// kernel: tpu_custom_call.1
$region0: #{tpu_custom_call.1}
  #allocation0 [shape = 'u32[]', space=smem, size = 0x4, offset = 0x4, fixed_abs, tag = 'smem constant byte address 0x4 - core index']
  #allocation1 [shape = 'u32[144,128]{1,0:T(1,128)}', space=vmem, size = 0x12000, scoped, tag = 'internal scratch']
  %s0 = inlined_call_operand.hbm [shape: f32[2,8,128], index: 0, kind: input, shape index: {}]
  %s1 = inlined_call_operand.hbm [shape: f32[1,8,128], index: 1, kind: output, shape index: {}]
  %s2 = sld [smem:[#allocation0]]
  $region18: #{tpu_custom_call.1} parent=0
    _
  %s4 = ssub.s32 1, %s2
  %s5 = scalar_select 0, %s4, %s2
  $region1: #{tpu_custom_call.1} parent=0
    #allocation2 [shape = 'u8[8192]{0}', space=vmem, size = 0x2000, scoped, tag = 'input window, operand 0, single buffered']
    #allocation3 [shape = 's32[1]{0}', space=sflag, size = 0x4, scoped, tag = 'scoped memory for tpu_custom_call.1']
    #allocation4 [shape = 's32[1]{0}', space=sflag, size = 0x4, scoped, tag = 'scoped memory for tpu_custom_call.1']
    #allocation5 [shape = 'u8[4096]{0}', space=vmem, size = 0x1000, scoped, tag = 'output window, operand 0, single buffered']
    %6 = vsyncpa [#allocation3], 0
    %7 = vsyncpa [#allocation4], 0
    // Predicated region
    $region2: #{tpu_custom_call.1} parent=1 // pred_check
      _
    $region3: #{tpu_custom_call.1} parent=1 // pred_check_branch
      %9 = sbr.rel (0) target = $region5
    $region4: #{tpu_custom_call.1} parent=1 // pred_region
      %s11 = ssub.s32 256, 256
      %12 = vsyncadd [#allocation3], %s11
      %s13 = sshll.u32 [#allocation2], 4
      %s14 = int_to_ptr.vmem [resolvable:$true] %s13
      %19 = dma.hbm_to_vmem [thread:$0]  %s0, 256, %s14, [#allocation3], 128, 128, 8
    $region5: #{tpu_custom_call.1} parent=1 // pred_fallthru
      _
    // Predicated region
    $region6: #{tpu_custom_call.1} parent=1 // pred_check
      _
    $region7: #{tpu_custom_call.1} parent=1 // pred_check_branch
      %21 = sbr.rel (0) target = $region9
    $region8: #{tpu_custom_call.1} parent=1 // pred_region
      %22 = dma.done [#allocation3], 256
    $region9: #{tpu_custom_call.1} parent=1 // pred_fallthru
      _
    %v23 = vld [vmem:[#allocation2] sm:$0xff]
    %s24 = scalar_lea.vmem [#allocation2], 8
    %v25 = vld [vmem:[%s24] sm:$0xff]
    %v26 = vsub.f32 %v23, %v25
    %v27 = vmul.f32 %v26, %v26
    %28 = vst [vmem:[#allocation5] sm:$0xff] %v27
    // Predicated region
    $region10: #{tpu_custom_call.1} parent=1 // pred_check
      _
    $region11: #{tpu_custom_call.1} parent=1 // pred_check_branch
      %30 = sbr.rel (0) target = $region13
    $region12: #{tpu_custom_call.1} parent=1 // pred_region
      %s32 = ssub.s32 128, 128
      %33 = vsyncadd [#allocation4], %s32
      %s35 = sshll.u32 [#allocation5], 4
      %s36 = int_to_ptr.vmem [resolvable:$true] %s35
      %38 = dma.vmem_to_hbm [thread:$0]  %s36, 128, %s1, [#allocation4]
    $region13: #{tpu_custom_call.1} parent=1 // pred_fallthru
      _
    // Predicated region
    $region14: #{tpu_custom_call.1} parent=1 // pred_check
      _
    $region15: #{tpu_custom_call.1} parent=1 // pred_check_branch
      %40 = sbr.rel (0) target = $region17
    $region16: #{tpu_custom_call.1} parent=1 // pred_region
      %41 = dma.done [#allocation4], 128
    $region17: #{tpu_custom_call.1} parent=1 // pred_fallthru
      _
    %42 = vsyncpa [#allocation3], 1
    %43 = vsyncpa [#allocation4], 1

</llo_original>
